<compile_context>
chip_gen: v5e
topology: v5e:2x2
jax: 0.10.0
libtpu: 0.0.40
codegen_flags: <defaults>
</compile_context>

<pallas_src>
import jax
import jax.numpy as jnp
from jax.experimental import pallas as pl
from jax.experimental.pallas import tpu as pltpu


def _round_up(n, m):
    return ((n + m - 1) // m) * m


def _mlp_kernel(*refs):
    """refs = (x_ref, w0_ref, b0_ref, w1_ref, b1_ref, ..., out_ref).

    Weights arrive pre-transposed and padded to (K, N); biases as (1, N) f32.
    ReLU after every layer except the last (matches nn.Sequential).
    """
    x_ref = refs[0]
    out_ref = refs[-1]
    wb_refs = refs[1:-1]
    n_layers = len(wb_refs) // 2

    h = x_ref[...].astype(jnp.float32)                # (TM, K) f32
    for i in range(n_layers):                         # unrolled at trace time
        w = wb_refs[2 * i][...]                       # (K, N), f32 or bf16
        b = wb_refs[2 * i + 1][...]                   # (1, N), f32
        prec = (jax.lax.Precision.HIGHEST
                if w.dtype == jnp.float32 else jax.lax.Precision.DEFAULT)
        h = jnp.dot(h.astype(w.dtype), w,
                    preferred_element_type=jnp.float32,
                    precision=prec) + b               # bias-add in f32
        if i < n_layers - 1:
            h = jnp.maximum(h, 0.0)                   # ReLU on VPU, f32
    out_ref[...] = h.astype(out_ref.dtype)


def prepare_params(params, *, pad_to=128, param_dtype=jnp.float32):
    """Hoisted, one-time param prep: transpose (out,in)->(in,out), zero-pad
    every feature dim up to a multiple of `pad_to` (lane-dense), optional cast."""
    prepared = []
    for w, b in params:
        dout, din = w.shape
        kp, np_ = _round_up(din, pad_to), _round_up(dout, pad_to)
        w_t = jnp.zeros((kp, np_), param_dtype)
        w_t = w_t.at[:din, :dout].set(jnp.transpose(w).astype(param_dtype))
        b2 = jnp.zeros((1, np_), jnp.float32).at[:, :dout].set(b)
        prepared.append((w_t, b2))
    return prepared


def make_simple_mlp(params, *, tm=128, pad_to=128, param_dtype=jnp.float32):
    """Returns a jitted forward(x) for SimpleMLP with weights baked in."""
    prepared = prepare_params(params, pad_to=pad_to, param_dtype=param_dtype)
    in_size = params[0][0].shape[1]
    out_size = params[-1][0].shape[0]
    k_in = prepared[0][0].shape[0]      # padded input dim
    o_pad = prepared[-1][0].shape[1]    # padded output dim

    flat_wb = []
    for w, b in prepared:
        flat_wb += [w, b]

    wb_bytes = sum(w.size * w.dtype.itemsize + b.size * 4 for w, b in prepared)

    def forward(x):
        B = x.shape[0]
        TM = min(tm, _round_up(B, 8))
        Bp = _round_up(B, TM)
        # Pad batch to a TM multiple and input dim to the lane-dense width.
        xp = jnp.zeros((Bp, k_in), jnp.float32).at[:B, :in_size].set(
            x.astype(jnp.float32))

        grid = (Bp // TM,)
        # x streams per batch tile; weights/biases keep a constant block index
        # -> fetched once, VMEM-resident across grid steps.
        in_specs = [pl.BlockSpec((TM, k_in), lambda i: (i, 0))]
        for w, b in prepared:
            in_specs.append(pl.BlockSpec(w.shape, lambda i: (0, 0)))
            in_specs.append(pl.BlockSpec(b.shape, lambda i: (0, 0)))
        out_spec = pl.BlockSpec((TM, o_pad), lambda i: (i, 0))  # lane-dense out

        flops = 2 * Bp * sum(w.shape[0] * w.shape[1] for w, _ in prepared)
        bytes_accessed = xp.size * 4 + Bp * o_pad * 4 + wb_bytes
        vmem_needed = 2 * (TM * k_in * 4 + TM * o_pad * 4 + wb_bytes) + (2 << 20)
        vmem_limit = int(min(max(vmem_needed, 32 << 20), 64 << 20))

        out_pad = pl.pallas_call(
            _mlp_kernel,
            out_shape=jax.ShapeDtypeStruct((Bp, o_pad), jnp.float32),
            grid_spec=pl.GridSpec(grid=grid, in_specs=in_specs,
                                  out_specs=out_spec),
            compiler_params=pltpu.CompilerParams(
                dimension_semantics=("parallel",),
                vmem_limit_bytes=vmem_limit),
            cost_estimate=pl.CostEstimate(
                flops=flops, transcendentals=0, bytes_accessed=bytes_accessed),
        )(xp, *flat_wb)
        return out_pad[:B, :out_size]

    return jax.jit(forward)


def _reference_forward(x, params):
    """Pure-JAX reference matching SimpleMLP.forward."""
    h = x
    n = len(params)
    for i, (w, b) in enumerate(params):
        h = h @ w.T + b
        if i < n - 1:
            h = jnp.maximum(h, 0.0)
    return h


def init_params(key, input_size, hidden_size, output_size, num_layers=2):
    """Deterministic init with the same layer structure/shapes as SimpleMLP."""
    dims = [input_size] + [hidden_size] * num_layers + [output_size]
    params = []
    keys = jax.random.split(key, len(dims) - 1)
    for k, (din, dout) in zip(keys, zip(dims[:-1], dims[1:])):
        kw, kb = jax.random.split(k)
        bound = 1.0 / jnp.sqrt(din)
        w = jax.random.uniform(kw, (dout, din), jnp.float32, -bound, bound)
        b = jax.random.uniform(kb, (dout,), jnp.float32, -bound, bound)
        params.append((w, b))
    return params


if __name__ == "__main__":
    B, I, H, O, NL = 8, 16, 32, 8, 2
    key = jax.random.PRNGKey(0)
    k_x, k_p = jax.random.split(key)
    x = jax.random.normal(k_x, (B, I), jnp.float32)
    params = init_params(k_p, I, H, O, NL)

    mlp = make_simple_mlp(params)          # param prep hoisted out of forward
    out = jax.block_until_ready(mlp(x))

    ref = _reference_forward(x, params)
    assert out.shape == (B, O), out.shape
    assert jnp.allclose(out, ref, atol=1e-5, rtol=1e-5), (out, ref)
    print("KERNEL_OK")
</pallas_src>

<mosaic_0001>
module attributes {stable_mosaic.version = 11 : i64} {
  func.func @_mlp_kernel(%arg0: i32, %arg1: memref<8x128xf32, #tpu.memory_space<vmem>>, %arg2: memref<128x128xf32, #tpu.memory_space<vmem>>, %arg3: memref<1x128xf32, #tpu.memory_space<vmem>>, %arg4: memref<128x128xf32, #tpu.memory_space<vmem>>, %arg5: memref<1x128xf32, #tpu.memory_space<vmem>>, %arg6: memref<128x128xf32, #tpu.memory_space<vmem>>, %arg7: memref<1x128xf32, #tpu.memory_space<vmem>>, %arg8: memref<8x128xf32, #tpu.memory_space<vmem>>) attributes {dimension_semantics = [#tpu.dimension_semantics<parallel>], iteration_bounds = array<i64: 1>, scalar_prefetch = 0 : i64, scratch_operands = 0 : i64, tpu.core_type = #tpu.core_type<tc>, window_params = [{transform_indices = @transform_0, window_bounds = array<i64: 8, 128>}, {pipeline_mode = #tpu.pipeline_mode<synchronous>, transform_indices = @transform_1, window_bounds = array<i64: 128, 128>}, {pipeline_mode = #tpu.pipeline_mode<synchronous>, transform_indices = @transform_2, window_bounds = array<i64: 1, 128>}, {pipeline_mode = #tpu.pipeline_mode<synchronous>, transform_indices = @transform_3, window_bounds = array<i64: 128, 128>}, {pipeline_mode = #tpu.pipeline_mode<synchronous>, transform_indices = @transform_4, window_bounds = array<i64: 1, 128>}, {pipeline_mode = #tpu.pipeline_mode<synchronous>, transform_indices = @transform_5, window_bounds = array<i64: 128, 128>}, {pipeline_mode = #tpu.pipeline_mode<synchronous>, transform_indices = @transform_6, window_bounds = array<i64: 1, 128>}, {transform_indices = @transform_7, window_bounds = array<i64: 8, 128>}]} {
    %c0 = arith.constant 0 : index
    %c0_0 = arith.constant 0 : index
    %0 = vector.load %arg1[%c0, %c0_0] : memref<8x128xf32, #tpu.memory_space<vmem>>, vector<8x128xf32>
    %c0_1 = arith.constant 0 : index
    %c0_2 = arith.constant 0 : index
    %1 = vector.load %arg2[%c0_1, %c0_2] : memref<128x128xf32, #tpu.memory_space<vmem>>, vector<128x128xf32>
    %c0_3 = arith.constant 0 : index
    %c0_4 = arith.constant 0 : index
    %2 = vector.load %arg3[%c0_3, %c0_4] : memref<1x128xf32, #tpu.memory_space<vmem>>, vector<1x128xf32>
    %cst = arith.constant dense<0.000000e+00> : vector<8x128xf32>
    %3 = tpu.matmul %0, %1, %cst {dimension_numbers = #tpu.dot_dimension_numbers<[1], [0], [0], [1], [0, 0, 1, 1], [], []>, precision = #tpu.contract_precision<fp32>} : vector<8x128xf32>, vector<128x128xf32>, vector<8x128xf32> -> vector<8x128xf32>
    %4 = vector.broadcast %2 : vector<1x128xf32> to vector<8x128xf32>
    %5 = arith.addf %3, %4 : vector<8x128xf32>
    %cst_5 = arith.constant 0.000000e+00 : f32
    %6 = vector.broadcast %cst_5 : f32 to vector<8x128xf32>
    %7 = arith.maximumf %5, %6 : vector<8x128xf32>
    %c0_6 = arith.constant 0 : index
    %c0_7 = arith.constant 0 : index
    %8 = vector.load %arg4[%c0_6, %c0_7] : memref<128x128xf32, #tpu.memory_space<vmem>>, vector<128x128xf32>
    %c0_8 = arith.constant 0 : index
    %c0_9 = arith.constant 0 : index
    %9 = vector.load %arg5[%c0_8, %c0_9] : memref<1x128xf32, #tpu.memory_space<vmem>>, vector<1x128xf32>
    %cst_10 = arith.constant dense<0.000000e+00> : vector<8x128xf32>
    %10 = tpu.matmul %7, %8, %cst_10 {dimension_numbers = #tpu.dot_dimension_numbers<[1], [0], [0], [1], [0, 0, 1, 1], [], []>, precision = #tpu.contract_precision<fp32>} : vector<8x128xf32>, vector<128x128xf32>, vector<8x128xf32> -> vector<8x128xf32>
    %11 = vector.broadcast %9 : vector<1x128xf32> to vector<8x128xf32>
    %12 = arith.addf %10, %11 : vector<8x128xf32>
    %cst_11 = arith.constant 0.000000e+00 : f32
    %13 = vector.broadcast %cst_11 : f32 to vector<8x128xf32>
    %14 = arith.maximumf %12, %13 : vector<8x128xf32>
    %c0_12 = arith.constant 0 : index
    %c0_13 = arith.constant 0 : index
    %15 = vector.load %arg6[%c0_12, %c0_13] : memref<128x128xf32, #tpu.memory_space<vmem>>, vector<128x128xf32>
    %c0_14 = arith.constant 0 : index
    %c0_15 = arith.constant 0 : index
    %16 = vector.load %arg7[%c0_14, %c0_15] : memref<1x128xf32, #tpu.memory_space<vmem>>, vector<1x128xf32>
    %cst_16 = arith.constant dense<0.000000e+00> : vector<8x128xf32>
    %17 = tpu.matmul %14, %15, %cst_16 {dimension_numbers = #tpu.dot_dimension_numbers<[1], [0], [0], [1], [0, 0, 1, 1], [], []>, precision = #tpu.contract_precision<fp32>} : vector<8x128xf32>, vector<128x128xf32>, vector<8x128xf32> -> vector<8x128xf32>
    %18 = vector.broadcast %16 : vector<1x128xf32> to vector<8x128xf32>
    %19 = arith.addf %17, %18 : vector<8x128xf32>
    %c0_17 = arith.constant 0 : index
    %c0_18 = arith.constant 0 : index
    %20 = vector.load %arg8[%c0_17, %c0_18] : memref<8x128xf32, #tpu.memory_space<vmem>>, vector<8x128xf32>
    tpu.vector_store %arg8[%c0_17, %c0_18], %19 {strides = array<i32>} : memref<8x128xf32, #tpu.memory_space<vmem>>, vector<8x128xf32>,
    return
  }
  func.func @transform_0(%arg0: i32) -> (i32, i32) {
    %c0_i32 = arith.constant 0 : i32
    %c0_i32_0 = arith.constant 0 : i32
    return %arg0, %c0_i32 : i32, i32
  }
  func.func @transform_1(%arg0: i32) -> (i32, i32) {
    %c0_i32 = arith.constant 0 : i32
    %c0_i32_0 = arith.constant 0 : i32
    %c0_i32_1 = arith.constant 0 : i32
    return %c0_i32, %c0_i32_0 : i32, i32
  }
  func.func @transform_2(%arg0: i32) -> (i32, i32) {
    %c0_i32 = arith.constant 0 : i32
    %c0_i32_0 = arith.constant 0 : i32
    %c0_i32_1 = arith.constant 0 : i32
    return %c0_i32, %c0_i32_0 : i32, i32
  }
  func.func @transform_3(%arg0: i32) -> (i32, i32) {
    %c0_i32 = arith.constant 0 : i32
    %c0_i32_0 = arith.constant 0 : i32
    %c0_i32_1 = arith.constant 0 : i32
    return %c0_i32, %c0_i32_0 : i32, i32
  }
  func.func @transform_4(%arg0: i32) -> (i32, i32) {
    %c0_i32 = arith.constant 0 : i32
    %c0_i32_0 = arith.constant 0 : i32
    %c0_i32_1 = arith.constant 0 : i32
    return %c0_i32, %c0_i32_0 : i32, i32
  }
  func.func @transform_5(%arg0: i32) -> (i32, i32) {
    %c0_i32 = arith.constant 0 : i32
    %c0_i32_0 = arith.constant 0 : i32
    %c0_i32_1 = arith.constant 0 : i32
    return %c0_i32, %c0_i32_0 : i32, i32
  }
  func.func @transform_6(%arg0: i32) -> (i32, i32) {
    %c0_i32 = arith.constant 0 : i32
    %c0_i32_0 = arith.constant 0 : i32
    %c0_i32_1 = arith.constant 0 : i32
    return %c0_i32, %c0_i32_0 : i32, i32
  }
  func.func @transform_7(%arg0: i32) -> (i32, i32) {
    %c0_i32 = arith.constant 0 : i32
    %c0_i32_0 = arith.constant 0 : i32
    return %arg0, %c0_i32 : i32, i32
  }
}

</mosaic_0001>

<llo_original>
// kernel: forward.1
$region0: #{forward.1}
  #allocation0 [shape = 'u32[]', space=smem, size = 0x4, offset = 0x4, fixed_abs, tag = 'smem constant byte address 0x4 - core index']
  #allocation1 [shape = 'u32[72,128]{1,0:T(1,128)}', space=vmem, size = 0x9000, scoped, tag = 'internal scratch']
  %s0 = inlined_call_operand.vmem [shape: f32[8,128], index: 0, kind: input, shape index: {}]
  %s1 = inlined_call_operand.hbm [shape: f32[128,128], index: 1, kind: input, shape index: {}]
  %s2 = inlined_call_operand.vmem [shape: f32[1,128], index: 2, kind: input, shape index: {}]
  %s3 = inlined_call_operand.hbm [shape: f32[128,128], index: 3, kind: input, shape index: {}]
  %s4 = inlined_call_operand.vmem [shape: f32[1,128], index: 4, kind: input, shape index: {}]
  %s5 = inlined_call_operand.hbm [shape: f32[128,128], index: 5, kind: input, shape index: {}]
  %s6 = inlined_call_operand.vmem [shape: f32[1,128], index: 6, kind: input, shape index: {}]
  %s7 = inlined_call_operand.hbm [shape: f32[8,128], index: 7, kind: output, shape index: {}]
  %s8 = sld [smem:[#allocation0]]
  $region50: #{forward.1} parent=0
    _
  %s10 = ssub.s32 1, %s8
  %s11 = scalar_select 0, %s10, %s8
  $region1: #{forward.1} parent=0
    #allocation2 [shape = 'u8[65536]{0}', space=vmem, size = 0x10000, scoped, tag = 'input window, operand 1, single buffered']
    #allocation3 [shape = 's32[1]{0}', space=sflag, size = 0x4, scoped, tag = 'scoped memory for forward.1']
    #allocation4 [shape = 's32[1]{0}', space=sflag, size = 0x4, scoped, tag = 'scoped memory for forward.1']
    #allocation5 [shape = 'u8[65536]{0}', space=vmem, size = 0x10000, scoped, tag = 'input window, operand 3, single buffered']
    #allocation6 [shape = 's32[1]{0}', space=sflag, size = 0x4, scoped, tag = 'scoped memory for forward.1']
    #allocation7 [shape = 'u8[65536]{0}', space=vmem, size = 0x10000, scoped, tag = 'input window, operand 5, single buffered']
    #allocation8 [shape = 'u8[4096]{0}', space=vmem, size = 0x1000, scoped, tag = 'output window, operand 0, single buffered']
    %12 = vsyncpa [#allocation3], 0
    %13 = vsyncpa [#allocation6], 0
    %14 = vsyncpa [#allocation4], 0
    // Predicated region
    $region2: #{forward.1} parent=1 // pred_check
      _
    $region3: #{forward.1} parent=1 // pred_check_branch
      %16 = sbr.rel (0) target = $region5
    $region4: #{forward.1} parent=1 // pred_region
      _
    $region5: #{forward.1} parent=1 // pred_fallthru
      _
    // Predicated region
    $region6: #{forward.1} parent=1 // pred_check
      _
    $region7: #{forward.1} parent=1 // pred_check_branch
      %18 = sbr.rel (0) target = $region9
    $region8: #{forward.1} parent=1 // pred_region
      %20 = vsyncadd [#allocation3], 0
      %s21 = sshll.u32 %s1, 4
      %s22 = int_to_ptr.hbm [resolvable:$true] %s21
      %s23 = sshll.u32 [#allocation2], 4
      %s24 = int_to_ptr.vmem [resolvable:$true] %s23
      %29 = dma.hbm_to_vmem [thread:$0]  %s22, 2048, %s24, [#allocation3], 128, 128, 8
    $region9: #{forward.1} parent=1 // pred_fallthru
      _
    // Predicated region
    $region10: #{forward.1} parent=1 // pred_check
      _
    $region11: #{forward.1} parent=1 // pred_check_branch
      %31 = sbr.rel (0) target = $region13
    $region12: #{forward.1} parent=1 // pred_region
      _
    $region13: #{forward.1} parent=1 // pred_fallthru
      _
    // Predicated region
    $region14: #{forward.1} parent=1 // pred_check
      _
    $region15: #{forward.1} parent=1 // pred_check_branch
      %33 = sbr.rel (0) target = $region17
    $region16: #{forward.1} parent=1 // pred_region
      %35 = vsyncadd [#allocation6], 0
      %s36 = sshll.u32 %s3, 4
      %s37 = int_to_ptr.hbm [resolvable:$true] %s36
      %s38 = sshll.u32 [#allocation5], 4
      %s39 = int_to_ptr.vmem [resolvable:$true] %s38
      %44 = dma.hbm_to_vmem [thread:$0]  %s37, 2048, %s39, [#allocation6], 128, 128, 8
    $region17: #{forward.1} parent=1 // pred_fallthru
      _
    // Predicated region
    $region18: #{forward.1} parent=1 // pred_check
      _
    $region19: #{forward.1} parent=1 // pred_check_branch
      %46 = sbr.rel (0) target = $region21
    $region20: #{forward.1} parent=1 // pred_region
      _
    $region21: #{forward.1} parent=1 // pred_fallthru
      _
    // Predicated region
    $region22: #{forward.1} parent=1 // pred_check
      _
    $region23: #{forward.1} parent=1 // pred_check_branch
      %48 = sbr.rel (0) target = $region25
    $region24: #{forward.1} parent=1 // pred_region
      %50 = vsyncadd [#allocation6], 0
      %s51 = sshll.u32 %s5, 4
      %s52 = int_to_ptr.hbm [resolvable:$true] %s51
      %s53 = sshll.u32 [#allocation7], 4
      %s54 = int_to_ptr.vmem [resolvable:$true] %s53
      %59 = dma.hbm_to_vmem [thread:$0]  %s52, 2048, %s54, [#allocation6], 128, 128, 8
    $region25: #{forward.1} parent=1 // pred_fallthru
      _
    // Predicated region
    $region26: #{forward.1} parent=1 // pred_check
      _
    $region27: #{forward.1} parent=1 // pred_check_branch
      %61 = sbr.rel (0) target = $region29
    $region28: #{forward.1} parent=1 // pred_region
      _
    $region29: #{forward.1} parent=1 // pred_fallthru
      _
    // Predicated region
    $region30: #{forward.1} parent=1 // pred_check
      _
    $region31: #{forward.1} parent=1 // pred_check_branch
      %63 = sbr.rel (0) target = $region33
    $region32: #{forward.1} parent=1 // pred_region
      %65 = dma.done [#allocation3], 2048
    $region33: #{forward.1} parent=1 // pred_fallthru
      _
    // Predicated region
    $region34: #{forward.1} parent=1 // pred_check
      _
    $region35: #{forward.1} parent=1 // pred_check_branch
      %67 = sbr.rel (0) target = $region37
    $region36: #{forward.1} parent=1 // pred_region
      %69 = dma.done [#allocation6], 2048
    $region37: #{forward.1} parent=1 // pred_fallthru
      _
    // Predicated region
    $region38: #{forward.1} parent=1 // pred_check
      _
    $region39: #{forward.1} parent=1 // pred_check_branch
      %71 = sbr.rel (0) target = $region41
    $region40: #{forward.1} parent=1 // pred_region
      %73 = dma.done [#allocation6], 2048
    $region41: #{forward.1} parent=1 // pred_fallthru
      _
    %v74 = vld [vmem:[%s0] sm:$0xff]
    %v75 = vld [vmem:[#allocation2] sm:$0xff]
    %v76 = vld [vmem:[#allocation2 + $0x8] sm:$0xff]
    %v77 = vld [vmem:[#allocation2 + $0x10] sm:$0xff]
    %v78 = vld [vmem:[#allocation2 + $0x18] sm:$0xff]
    %v79 = vld [vmem:[#allocation2 + $0x20] sm:$0xff]
    %v80 = vld [vmem:[#allocation2 + $0x28] sm:$0xff]
    %v81 = vld [vmem:[#allocation2 + $0x30] sm:$0xff]
    %v82 = vld [vmem:[#allocation2 + $0x38] sm:$0xff]
    %v83 = vld [vmem:[#allocation2 + $0x40] sm:$0xff]
    %v84 = vld [vmem:[#allocation2 + $0x48] sm:$0xff]
    %v85 = vld [vmem:[#allocation2 + $0x50] sm:$0xff]
    %v86 = vld [vmem:[#allocation2 + $0x58] sm:$0xff]
    %v87 = vld [vmem:[#allocation2 + $0x60] sm:$0xff]
    %v88 = vld [vmem:[#allocation2 + $0x68] sm:$0xff]
    %v89 = vld [vmem:[#allocation2 + $0x70] sm:$0xff]
    %v90 = vld [vmem:[#allocation2 + $0x78] sm:$0xff]
    %v91 = vld [vmem:[%s2] sm:$0x1]
    %v93 = vperm.slane %v91, 0
    %v95 = vand.u32 %v90, 4294901760
    %96 = vmatpush.msra.mxu0 %v95
    %v97 = vand.u32 %v89, 4294901760
    %98 = vmatpush.msra.mxu0 %v97
    %v99 = vand.u32 %v88, 4294901760
    %100 = vmatpush.msra.mxu0 %v99
    %v101 = vand.u32 %v87, 4294901760
    %102 = vmatpush.msra.mxu0 %v101
    %v103 = vand.u32 %v86, 4294901760
    %104 = vmatpush.msra.mxu0 %v103
    %v105 = vand.u32 %v85, 4294901760
    %106 = vmatpush.msra.mxu0 %v105
    %v107 = vand.u32 %v84, 4294901760
    %108 = vmatpush.msra.mxu0 %v107
    %v109 = vand.u32 %v83, 4294901760
    %110 = vmatpush.msra.mxu0 %v109
    %v111 = vand.u32 %v82, 4294901760
    %112 = vmatpush.msra.mxu0 %v111
    %v113 = vand.u32 %v81, 4294901760
    %114 = vmatpush.msra.mxu0 %v113
    %v115 = vand.u32 %v80, 4294901760
    %116 = vmatpush.msra.mxu0 %v115
    %v117 = vand.u32 %v79, 4294901760
    %118 = vmatpush.msra.mxu0 %v117
    %v119 = vand.u32 %v78, 4294901760
    %120 = vmatpush.msra.mxu0 %v119
    %v121 = vand.u32 %v77, 4294901760
    %122 = vmatpush.msra.mxu0 %v121
    %v123 = vand.u32 %v76, 4294901760
    %124 = vmatpush.msra.mxu0 %v123
    %v125 = vand.u32 %v75, 4294901760
    %126 = vmatpush.msra.mxu0 %v125
    %v127 = vand.u32 %v74, 4294901760
    %v128 = vsub.f32 %v74, %v127
    %v129 = vand.u32 %v128, 4294901760
    %v130 = vsub.f32 %v128, %v129
    %v131 = vand.u32 %v130, 4294901760
    %132 = vmatmul.f32.gmra.mxu0 %v131
    %v133 = vpop.f32.mrf.mxu0
    %v134 = vadd.f32 %v93, %v133
    %135 = vdwg.mxu0
    %v136 = vand.u32 %v90, 4294901760
    %v137 = vsub.f32 %v90, %v136
    %v138 = vand.u32 %v137, 4294901760
    %v139 = vsub.f32 %v137, %v138
    %v140 = vand.u32 %v139, 4294901760
    %141 = vmatpush.msra.mxu0 %v140
    %v142 = vand.u32 %v89, 4294901760
    %v143 = vsub.f32 %v89, %v142
    %v144 = vand.u32 %v143, 4294901760
    %v145 = vsub.f32 %v143, %v144
    %v146 = vand.u32 %v145, 4294901760
    %147 = vmatpush.msra.mxu0 %v146
    %v148 = vand.u32 %v88, 4294901760
    %v149 = vsub.f32 %v88, %v148
    %v150 = vand.u32 %v149, 4294901760
    %v151 = vsub.f32 %v149, %v150
    %v152 = vand.u32 %v151, 4294901760
    %153 = vmatpush.msra.mxu0 %v152
    %v154 = vand.u32 %v87, 4294901760
    %v155 = vsub.f32 %v87, %v154
    %v156 = vand.u32 %v155, 4294901760
    %v157 = vsub.f32 %v155, %v156
    %v158 = vand.u32 %v157, 4294901760
    %159 = vmatpush.msra.mxu0 %v158
    %v160 = vand.u32 %v86, 4294901760
    %v161 = vsub.f32 %v86, %v160
    %v162 = vand.u32 %v161, 4294901760
    %v163 = vsub.f32 %v161, %v162
    %v164 = vand.u32 %v163, 4294901760
    %165 = vmatpush.msra.mxu0 %v164
    %v166 = vand.u32 %v85, 4294901760
    %v167 = vsub.f32 %v85, %v166
    %v168 = vand.u32 %v167, 4294901760
    %v169 = vsub.f32 %v167, %v168
    %v170 = vand.u32 %v169, 4294901760
    %171 = vmatpush.msra.mxu0 %v170
    %v172 = vand.u32 %v84, 4294901760
    %v173 = vsub.f32 %v84, %v172
    %v174 = vand.u32 %v173, 4294901760
    %v175 = vsub.f32 %v173, %v174
    %v176 = vand.u32 %v175, 4294901760
    %177 = vmatpush.msra.mxu0 %v176
    %v178 = vand.u32 %v83, 4294901760
    %v179 = vsub.f32 %v83, %v178
    %v180 = vand.u32 %v179, 4294901760
    %v181 = vsub.f32 %v179, %v180
    %v182 = vand.u32 %v181, 4294901760
    %183 = vmatpush.msra.mxu0 %v182
    %v184 = vand.u32 %v82, 4294901760
    %v185 = vsub.f32 %v82, %v184
    %v186 = vand.u32 %v185, 4294901760
    %v187 = vsub.f32 %v185, %v186
    %v188 = vand.u32 %v187, 4294901760
    %189 = vmatpush.msra.mxu0 %v188
    %v190 = vand.u32 %v81, 4294901760
    %v191 = vsub.f32 %v81, %v190
    %v192 = vand.u32 %v191, 4294901760
    %v193 = vsub.f32 %v191, %v192
    %v194 = vand.u32 %v193, 4294901760
    %195 = vmatpush.msra.mxu0 %v194
    %v196 = vand.u32 %v80, 4294901760
    %v197 = vsub.f32 %v80, %v196
    %v198 = vand.u32 %v197, 4294901760
    %v199 = vsub.f32 %v197, %v198
    %v200 = vand.u32 %v199, 4294901760
    %201 = vmatpush.msra.mxu0 %v200
    %v202 = vand.u32 %v79, 4294901760
    %v203 = vsub.f32 %v79, %v202
    %v204 = vand.u32 %v203, 4294901760
    %v205 = vsub.f32 %v203, %v204
    %v206 = vand.u32 %v205, 4294901760
    %207 = vmatpush.msra.mxu0 %v206
    %v208 = vand.u32 %v78, 4294901760
    %v209 = vsub.f32 %v78, %v208
    %v210 = vand.u32 %v209, 4294901760
    %v211 = vsub.f32 %v209, %v210
    %v212 = vand.u32 %v211, 4294901760
    %213 = vmatpush.msra.mxu0 %v212
    %v214 = vand.u32 %v77, 4294901760
    %v215 = vsub.f32 %v77, %v214
    %v216 = vand.u32 %v215, 4294901760
    %v217 = vsub.f32 %v215, %v216
    %v218 = vand.u32 %v217, 4294901760
    %219 = vmatpush.msra.mxu0 %v218
    %v220 = vand.u32 %v76, 4294901760
    %v221 = vsub.f32 %v76, %v220
    %v222 = vand.u32 %v221, 4294901760
    %v223 = vsub.f32 %v221, %v222
    %v224 = vand.u32 %v223, 4294901760
    %225 = vmatpush.msra.mxu0 %v224
    %v226 = vand.u32 %v75, 4294901760
    %v227 = vsub.f32 %v75, %v226
    %v228 = vand.u32 %v227, 4294901760
    %v229 = vsub.f32 %v227, %v228
    %v230 = vand.u32 %v229, 4294901760
    %231 = vmatpush.msra.mxu0 %v230
    %v232 = vand.u32 %v74, 4294901760
    %233 = vmatmul.f32.gmra.mxu0 %v232
    %v234 = vpop.f32.mrf.mxu0
    %v235 = vadd.f32 %v134, %v234
    %236 = vdwg.mxu0
    %v237 = vand.u32 %v90, 4294901760
    %v238 = vsub.f32 %v90, %v237
    %239 = vmatpush.msra.mxu0 %v238
    %v240 = vand.u32 %v89, 4294901760
    %v241 = vsub.f32 %v89, %v240
    %242 = vmatpush.msra.mxu0 %v241
    %v243 = vand.u32 %v88, 4294901760
    %v244 = vsub.f32 %v88, %v243
    %245 = vmatpush.msra.mxu0 %v244
    %v246 = vand.u32 %v87, 4294901760
    %v247 = vsub.f32 %v87, %v246
    %248 = vmatpush.msra.mxu0 %v247
    %v249 = vand.u32 %v86, 4294901760
    %v250 = vsub.f32 %v86, %v249
    %251 = vmatpush.msra.mxu0 %v250
    %v252 = vand.u32 %v85, 4294901760
    %v253 = vsub.f32 %v85, %v252
    %254 = vmatpush.msra.mxu0 %v253
    %v255 = vand.u32 %v84, 4294901760
    %v256 = vsub.f32 %v84, %v255
    %257 = vmatpush.msra.mxu0 %v256
    %v258 = vand.u32 %v83, 4294901760
    %v259 = vsub.f32 %v83, %v258
    %260 = vmatpush.msra.mxu0 %v259
    %v261 = vand.u32 %v82, 4294901760
    %v262 = vsub.f32 %v82, %v261
    %263 = vmatpush.msra.mxu0 %v262
    %v264 = vand.u32 %v81, 4294901760
    %v265 = vsub.f32 %v81, %v264
    %266 = vmatpush.msra.mxu0 %v265
    %v267 = vand.u32 %v80, 4294901760
    %v268 = vsub.f32 %v80, %v267
    %269 = vmatpush.msra.mxu0 %v268
    %v270 = vand.u32 %v79, 4294901760
    %v271 = vsub.f32 %v79, %v270
    %272 = vmatpush.msra.mxu0 %v271
    %v273 = vand.u32 %v78, 4294901760
    %v274 = vsub.f32 %v78, %v273
    %275 = vmatpush.msra.mxu0 %v274
    %v276 = vand.u32 %v77, 4294901760
    %v277 = vsub.f32 %v77, %v276
    %278 = vmatpush.msra.mxu0 %v277
    %v279 = vand.u32 %v76, 4294901760
    %v280 = vsub.f32 %v76, %v279
    %281 = vmatpush.msra.mxu0 %v280
    %v282 = vand.u32 %v75, 4294901760
    %v283 = vsub.f32 %v75, %v282
    %284 = vmatpush.msra.mxu0 %v283
    %v285 = vand.u32 %v74, 4294901760
    %v286 = vsub.f32 %v74, %v285
    %287 = vmatmul.f32.gmra.mxu0 %v286
    %v288 = vpop.f32.mrf.mxu0
    %v289 = vadd.f32 %v235, %v288
    %290 = vdwg.mxu0
    %v291 = vand.u32 %v90, 4294901760
    %292 = vmatpush.msra.mxu0 %v291
    %v293 = vand.u32 %v89, 4294901760
    %294 = vmatpush.msra.mxu0 %v293
    %v295 = vand.u32 %v88, 4294901760
    %296 = vmatpush.msra.mxu0 %v295
    %v297 = vand.u32 %v87, 4294901760
    %298 = vmatpush.msra.mxu0 %v297
    %v299 = vand.u32 %v86, 4294901760
    %300 = vmatpush.msra.mxu0 %v299
    %v301 = vand.u32 %v85, 4294901760
    %302 = vmatpush.msra.mxu0 %v301
    %v303 = vand.u32 %v84, 4294901760
    %304 = vmatpush.msra.mxu0 %v303
    %v305 = vand.u32 %v83, 4294901760
    %306 = vmatpush.msra.mxu0 %v305
    %v307 = vand.u32 %v82, 4294901760
    %308 = vmatpush.msra.mxu0 %v307
    %v309 = vand.u32 %v81, 4294901760
    %310 = vmatpush.msra.mxu0 %v309
    %v311 = vand.u32 %v80, 4294901760
    %312 = vmatpush.msra.mxu0 %v311
    %v313 = vand.u32 %v79, 4294901760
    %314 = vmatpush.msra.mxu0 %v313
    %v315 = vand.u32 %v78, 4294901760
    %316 = vmatpush.msra.mxu0 %v315
    %v317 = vand.u32 %v77, 4294901760
    %318 = vmatpush.msra.mxu0 %v317
    %v319 = vand.u32 %v76, 4294901760
    %320 = vmatpush.msra.mxu0 %v319
    %v321 = vand.u32 %v75, 4294901760
    %322 = vmatpush.msra.mxu0 %v321
    %v323 = vand.u32 %v74, 4294901760
    %v324 = vsub.f32 %v74, %v323
    %v325 = vand.u32 %v324, 4294901760
    %326 = vmatmul.f32.gmra.mxu0 %v325
    %v327 = vpop.f32.mrf.mxu0
    %v328 = vadd.f32 %v289, %v327
    %329 = vdwg.mxu0
    %v330 = vand.u32 %v90, 4294901760
    %v331 = vsub.f32 %v90, %v330
    %v332 = vand.u32 %v331, 4294901760
    %333 = vmatpush.msra.mxu0 %v332
    %v334 = vand.u32 %v89, 4294901760
    %v335 = vsub.f32 %v89, %v334
    %v336 = vand.u32 %v335, 4294901760
    %337 = vmatpush.msra.mxu0 %v336
    %v338 = vand.u32 %v88, 4294901760
    %v339 = vsub.f32 %v88, %v338
    %v340 = vand.u32 %v339, 4294901760
    %341 = vmatpush.msra.mxu0 %v340
    %v342 = vand.u32 %v87, 4294901760
    %v343 = vsub.f32 %v87, %v342
    %v344 = vand.u32 %v343, 4294901760
    %345 = vmatpush.msra.mxu0 %v344
    %v346 = vand.u32 %v86, 4294901760
    %v347 = vsub.f32 %v86, %v346
    %v348 = vand.u32 %v347, 4294901760
    %349 = vmatpush.msra.mxu0 %v348
    %v350 = vand.u32 %v85, 4294901760
    %v351 = vsub.f32 %v85, %v350
    %v352 = vand.u32 %v351, 4294901760
    %353 = vmatpush.msra.mxu0 %v352
    %v354 = vand.u32 %v84, 4294901760
    %v355 = vsub.f32 %v84, %v354
    %v356 = vand.u32 %v355, 4294901760
    %357 = vmatpush.msra.mxu0 %v356
    %v358 = vand.u32 %v83, 4294901760
    %v359 = vsub.f32 %v83, %v358
    %v360 = vand.u32 %v359, 4294901760
    %361 = vmatpush.msra.mxu0 %v360
    %v362 = vand.u32 %v82, 4294901760
    %v363 = vsub.f32 %v82, %v362
    %v364 = vand.u32 %v363, 4294901760
    %365 = vmatpush.msra.mxu0 %v364
    %v366 = vand.u32 %v81, 4294901760
    %v367 = vsub.f32 %v81, %v366
    %v368 = vand.u32 %v367, 4294901760
    %369 = vmatpush.msra.mxu0 %v368
    %v370 = vand.u32 %v80, 4294901760
    %v371 = vsub.f32 %v80, %v370
    %v372 = vand.u32 %v371, 4294901760
    %373 = vmatpush.msra.mxu0 %v372
    %v374 = vand.u32 %v79, 4294901760
    %v375 = vsub.f32 %v79, %v374
    %v376 = vand.u32 %v375, 4294901760
    %377 = vmatpush.msra.mxu0 %v376
    %v378 = vand.u32 %v78, 4294901760
    %v379 = vsub.f32 %v78, %v378
    %v380 = vand.u32 %v379, 4294901760
    %381 = vmatpush.msra.mxu0 %v380
    %v382 = vand.u32 %v77, 4294901760
    %v383 = vsub.f32 %v77, %v382
    %v384 = vand.u32 %v383, 4294901760
    %385 = vmatpush.msra.mxu0 %v384
    %v386 = vand.u32 %v76, 4294901760
    %v387 = vsub.f32 %v76, %v386
    %v388 = vand.u32 %v387, 4294901760
    %389 = vmatpush.msra.mxu0 %v388
    %v390 = vand.u32 %v75, 4294901760
    %v391 = vsub.f32 %v75, %v390
    %v392 = vand.u32 %v391, 4294901760
    %393 = vmatpush.msra.mxu0 %v392
    %v394 = vand.u32 %v74, 4294901760
    %395 = vmatmul.f32.gmra.mxu0 %v394
    %v396 = vpop.f32.mrf.mxu0
    %v397 = vadd.f32 %v328, %v396
    %398 = vdwg.mxu0
    %v399 = vand.u32 %v90, 4294901760
    %400 = vmatpush.msra.mxu0 %v399
    %v401 = vand.u32 %v89, 4294901760
    %402 = vmatpush.msra.mxu0 %v401
    %v403 = vand.u32 %v88, 4294901760
    %404 = vmatpush.msra.mxu0 %v403
    %v405 = vand.u32 %v87, 4294901760
    %406 = vmatpush.msra.mxu0 %v405
    %v407 = vand.u32 %v86, 4294901760
    %408 = vmatpush.msra.mxu0 %v407
    %v409 = vand.u32 %v85, 4294901760
    %410 = vmatpush.msra.mxu0 %v409
    %v411 = vand.u32 %v84, 4294901760
    %412 = vmatpush.msra.mxu0 %v411
    %v413 = vand.u32 %v83, 4294901760
    %414 = vmatpush.msra.mxu0 %v413
    %v415 = vand.u32 %v82, 4294901760
    %416 = vmatpush.msra.mxu0 %v415
    %v417 = vand.u32 %v81, 4294901760
    %418 = vmatpush.msra.mxu0 %v417
    %v419 = vand.u32 %v80, 4294901760
    %420 = vmatpush.msra.mxu0 %v419
    %v421 = vand.u32 %v79, 4294901760
    %422 = vmatpush.msra.mxu0 %v421
    %v423 = vand.u32 %v78, 4294901760
    %424 = vmatpush.msra.mxu0 %v423
    %v425 = vand.u32 %v77, 4294901760
    %426 = vmatpush.msra.mxu0 %v425
    %v427 = vand.u32 %v76, 4294901760
    %428 = vmatpush.msra.mxu0 %v427
    %v429 = vand.u32 %v75, 4294901760
    %430 = vmatpush.msra.mxu0 %v429
    %v431 = vand.u32 %v74, 4294901760
    %432 = vmatmul.f32.gmra.mxu0 %v431
    %v433 = vpop.f32.mrf.mxu0
    %v434 = vadd.f32 %v397, %v433
    %435 = vdwg.mxu0
    %v436 = vmax.f32 %v434, 0.0
    %v437 = vld [vmem:[#allocation5] sm:$0xff]
    %v438 = vld [vmem:[#allocation5 + $0x8] sm:$0xff]
    %v439 = vld [vmem:[#allocation5 + $0x10] sm:$0xff]
    %v440 = vld [vmem:[#allocation5 + $0x18] sm:$0xff]
    %v441 = vld [vmem:[#allocation5 + $0x20] sm:$0xff]
    %v442 = vld [vmem:[#allocation5 + $0x28] sm:$0xff]
    %v443 = vld [vmem:[#allocation5 + $0x30] sm:$0xff]
    %v444 = vld [vmem:[#allocation5 + $0x38] sm:$0xff]
    %v445 = vld [vmem:[#allocation5 + $0x40] sm:$0xff]
    %v446 = vld [vmem:[#allocation5 + $0x48] sm:$0xff]
    %v447 = vld [vmem:[#allocation5 + $0x50] sm:$0xff]
    %v448 = vld [vmem:[#allocation5 + $0x58] sm:$0xff]
    %v449 = vld [vmem:[#allocation5 + $0x60] sm:$0xff]
    %v450 = vld [vmem:[#allocation5 + $0x68] sm:$0xff]
    %v451 = vld [vmem:[#allocation5 + $0x70] sm:$0xff]
    %v452 = vld [vmem:[#allocation5 + $0x78] sm:$0xff]
    %v453 = vld [vmem:[%s4] sm:$0x1]
    %v455 = vperm.slane %v453, 0
    %v457 = vand.u32 %v452, 4294901760
    %458 = vmatpush.msra.mxu0 %v457
    %v459 = vand.u32 %v451, 4294901760
    %460 = vmatpush.msra.mxu0 %v459
    %v461 = vand.u32 %v450, 4294901760
    %462 = vmatpush.msra.mxu0 %v461
    %v463 = vand.u32 %v449, 4294901760
    %464 = vmatpush.msra.mxu0 %v463
    %v465 = vand.u32 %v448, 4294901760
    %466 = vmatpush.msra.mxu0 %v465
    %v467 = vand.u32 %v447, 4294901760
    %468 = vmatpush.msra.mxu0 %v467
    %v469 = vand.u32 %v446, 4294901760
    %470 = vmatpush.msra.mxu0 %v469
    %v471 = vand.u32 %v445, 4294901760
    %472 = vmatpush.msra.mxu0 %v471
    %v473 = vand.u32 %v444, 4294901760
    %474 = vmatpush.msra.mxu0 %v473
    %v475 = vand.u32 %v443, 4294901760
    %476 = vmatpush.msra.mxu0 %v475
    %v477 = vand.u32 %v442, 4294901760
    %478 = vmatpush.msra.mxu0 %v477
    %v479 = vand.u32 %v441, 4294901760
    %480 = vmatpush.msra.mxu0 %v479
    %v481 = vand.u32 %v440, 4294901760
    %482 = vmatpush.msra.mxu0 %v481
    %v483 = vand.u32 %v439, 4294901760
    %484 = vmatpush.msra.mxu0 %v483
    %v485 = vand.u32 %v438, 4294901760
    %486 = vmatpush.msra.mxu0 %v485
    %v487 = vand.u32 %v437, 4294901760
    %488 = vmatpush.msra.mxu0 %v487
    %v489 = vand.u32 %v436, 4294901760
    %v490 = vsub.f32 %v436, %v489
    %v491 = vand.u32 %v490, 4294901760
    %v492 = vsub.f32 %v490, %v491
    %v493 = vand.u32 %v492, 4294901760
    %494 = vmatmul.f32.gmra.mxu0 %v493
    %v495 = vpop.f32.mrf.mxu0
    %v496 = vadd.f32 %v455, %v495
    %497 = vdwg.mxu0
    %v498 = vand.u32 %v452, 4294901760
    %v499 = vsub.f32 %v452, %v498
    %v500 = vand.u32 %v499, 4294901760
    %v501 = vsub.f32 %v499, %v500
    %v502 = vand.u32 %v501, 4294901760
    %503 = vmatpush.msra.mxu0 %v502
    %v504 = vand.u32 %v451, 4294901760
    %v505 = vsub.f32 %v451, %v504
    %v506 = vand.u32 %v505, 4294901760
    %v507 = vsub.f32 %v505, %v506
    %v508 = vand.u32 %v507, 4294901760
    %509 = vmatpush.msra.mxu0 %v508
    %v510 = vand.u32 %v450, 4294901760
    %v511 = vsub.f32 %v450, %v510
    %v512 = vand.u32 %v511, 4294901760
    %v513 = vsub.f32 %v511, %v512
    %v514 = vand.u32 %v513, 4294901760
    %515 = vmatpush.msra.mxu0 %v514
    %v516 = vand.u32 %v449, 4294901760
    %v517 = vsub.f32 %v449, %v516
    %v518 = vand.u32 %v517, 4294901760
    %v519 = vsub.f32 %v517, %v518
    %v520 = vand.u32 %v519, 4294901760
    %521 = vmatpush.msra.mxu0 %v520
    %v522 = vand.u32 %v448, 4294901760
    %v523 = vsub.f32 %v448, %v522
    %v524 = vand.u32 %v523, 4294901760
    %v525 = vsub.f32 %v523, %v524
    %v526 = vand.u32 %v525, 4294901760
    %527 = vmatpush.msra.mxu0 %v526
    %v528 = vand.u32 %v447, 4294901760
    %v529 = vsub.f32 %v447, %v528
    %v530 = vand.u32 %v529, 4294901760
    %v531 = vsub.f32 %v529, %v530
    %v532 = vand.u32 %v531, 4294901760
    %533 = vmatpush.msra.mxu0 %v532
    %v534 = vand.u32 %v446, 4294901760
    %v535 = vsub.f32 %v446, %v534
    %v536 = vand.u32 %v535, 4294901760
    %v537 = vsub.f32 %v535, %v536
    %v538 = vand.u32 %v537, 4294901760
    %539 = vmatpush.msra.mxu0 %v538
    %v540 = vand.u32 %v445, 4294901760
    %v541 = vsub.f32 %v445, %v540
    %v542 = vand.u32 %v541, 4294901760
    %v543 = vsub.f32 %v541, %v542
    %v544 = vand.u32 %v543, 4294901760
    %545 = vmatpush.msra.mxu0 %v544
    %v546 = vand.u32 %v444, 4294901760
    %v547 = vsub.f32 %v444, %v546
    %v548 = vand.u32 %v547, 4294901760
    %v549 = vsub.f32 %v547, %v548
    %v550 = vand.u32 %v549, 4294901760
    %551 = vmatpush.msra.mxu0 %v550
    %v552 = vand.u32 %v443, 4294901760
    %v553 = vsub.f32 %v443, %v552
    %v554 = vand.u32 %v553, 4294901760
    %v555 = vsub.f32 %v553, %v554
    %v556 = vand.u32 %v555, 4294901760
    %557 = vmatpush.msra.mxu0 %v556
    %v558 = vand.u32 %v442, 4294901760
    %v559 = vsub.f32 %v442, %v558
    %v560 = vand.u32 %v559, 4294901760
    %v561 = vsub.f32 %v559, %v560
    %v562 = vand.u32 %v561, 4294901760
    %563 = vmatpush.msra.mxu0 %v562
    %v564 = vand.u32 %v441, 4294901760
    %v565 = vsub.f32 %v441, %v564
    %v566 = vand.u32 %v565, 4294901760
    %v567 = vsub.f32 %v565, %v566
    %v568 = vand.u32 %v567, 4294901760
    %569 = vmatpush.msra.mxu0 %v568
    %v570 = vand.u32 %v440, 4294901760
    %v571 = vsub.f32 %v440, %v570
    %v572 = vand.u32 %v571, 4294901760
    %v573 = vsub.f32 %v571, %v572
    %v574 = vand.u32 %v573, 4294901760
    %575 = vmatpush.msra.mxu0 %v574
    %v576 = vand.u32 %v439, 4294901760
    %v577 = vsub.f32 %v439, %v576
    %v578 = vand.u32 %v577, 4294901760
    %v579 = vsub.f32 %v577, %v578
    %v580 = vand.u32 %v579, 4294901760
    %581 = vmatpush.msra.mxu0 %v580
    %v582 = vand.u32 %v438, 4294901760
    %v583 = vsub.f32 %v438, %v582
    %v584 = vand.u32 %v583, 4294901760
    %v585 = vsub.f32 %v583, %v584
    %v586 = vand.u32 %v585, 4294901760
    %587 = vmatpush.msra.mxu0 %v586
    %v588 = vand.u32 %v437, 4294901760
    %v589 = vsub.f32 %v437, %v588
    %v590 = vand.u32 %v589, 4294901760
    %v591 = vsub.f32 %v589, %v590
    %v592 = vand.u32 %v591, 4294901760
    %593 = vmatpush.msra.mxu0 %v592
    %v594 = vand.u32 %v436, 4294901760
    %595 = vmatmul.f32.gmra.mxu0 %v594
    %v596 = vpop.f32.mrf.mxu0
    %v597 = vadd.f32 %v496, %v596
    %598 = vdwg.mxu0
    %v599 = vand.u32 %v452, 4294901760
    %v600 = vsub.f32 %v452, %v599
    %601 = vmatpush.msra.mxu0 %v600
    %v602 = vand.u32 %v451, 4294901760
    %v603 = vsub.f32 %v451, %v602
    %604 = vmatpush.msra.mxu0 %v603
    %v605 = vand.u32 %v450, 4294901760
    %v606 = vsub.f32 %v450, %v605
    %607 = vmatpush.msra.mxu0 %v606
    %v608 = vand.u32 %v449, 4294901760
    %v609 = vsub.f32 %v449, %v608
    %610 = vmatpush.msra.mxu0 %v609
    %v611 = vand.u32 %v448, 4294901760
    %v612 = vsub.f32 %v448, %v611
    %613 = vmatpush.msra.mxu0 %v612
    %v614 = vand.u32 %v447, 4294901760
    %v615 = vsub.f32 %v447, %v614
    %616 = vmatpush.msra.mxu0 %v615
    %v617 = vand.u32 %v446, 4294901760
    %v618 = vsub.f32 %v446, %v617
    %619 = vmatpush.msra.mxu0 %v618
    %v620 = vand.u32 %v445, 4294901760
    %v621 = vsub.f32 %v445, %v620
    %622 = vmatpush.msra.mxu0 %v621
    %v623 = vand.u32 %v444, 4294901760
    %v624 = vsub.f32 %v444, %v623
    %625 = vmatpush.msra.mxu0 %v624
    %v626 = vand.u32 %v443, 4294901760
    %v627 = vsub.f32 %v443, %v626
    %628 = vmatpush.msra.mxu0 %v627
    %v629 = vand.u32 %v442, 4294901760
    %v630 = vsub.f32 %v442, %v629
    %631 = vmatpush.msra.mxu0 %v630
    %v632 = vand.u32 %v441, 4294901760
    %v633 = vsub.f32 %v441, %v632
    %634 = vmatpush.msra.mxu0 %v633
    %v635 = vand.u32 %v440, 4294901760
    %v636 = vsub.f32 %v440, %v635
    %637 = vmatpush.msra.mxu0 %v636
    %v638 = vand.u32 %v439, 4294901760
    %v639 = vsub.f32 %v439, %v638
    %640 = vmatpush.msra.mxu0 %v639
    %v641 = vand.u32 %v438, 4294901760
    %v642 = vsub.f32 %v438, %v641
    %643 = vmatpush.msra.mxu0 %v642
    %v644 = vand.u32 %v437, 4294901760
    %v645 = vsub.f32 %v437, %v644
    %646 = vmatpush.msra.mxu0 %v645
    %v647 = vand.u32 %v436, 4294901760
    %v648 = vsub.f32 %v436, %v647
    %649 = vmatmul.f32.gmra.mxu0 %v648
    %v650 = vpop.f32.mrf.mxu0
    %v651 = vadd.f32 %v597, %v650
    %652 = vdwg.mxu0
    %v653 = vand.u32 %v452, 4294901760
    %654 = vmatpush.msra.mxu0 %v653
    %v655 = vand.u32 %v451, 4294901760
    %656 = vmatpush.msra.mxu0 %v655
    %v657 = vand.u32 %v450, 4294901760
    %658 = vmatpush.msra.mxu0 %v657
    %v659 = vand.u32 %v449, 4294901760
    %660 = vmatpush.msra.mxu0 %v659
    %v661 = vand.u32 %v448, 4294901760
    %662 = vmatpush.msra.mxu0 %v661
    %v663 = vand.u32 %v447, 4294901760
    %664 = vmatpush.msra.mxu0 %v663
    %v665 = vand.u32 %v446, 4294901760
    %666 = vmatpush.msra.mxu0 %v665
    %v667 = vand.u32 %v445, 4294901760
    %668 = vmatpush.msra.mxu0 %v667
    %v669 = vand.u32 %v444, 4294901760
    %670 = vmatpush.msra.mxu0 %v669
    %v671 = vand.u32 %v443, 4294901760
    %672 = vmatpush.msra.mxu0 %v671
    %v673 = vand.u32 %v442, 4294901760
    %674 = vmatpush.msra.mxu0 %v673
    %v675 = vand.u32 %v441, 4294901760
    %676 = vmatpush.msra.mxu0 %v675
    %v677 = vand.u32 %v440, 4294901760
    %678 = vmatpush.msra.mxu0 %v677
    %v679 = vand.u32 %v439, 4294901760
    %680 = vmatpush.msra.mxu0 %v679
    %v681 = vand.u32 %v438, 4294901760
    %682 = vmatpush.msra.mxu0 %v681
    %v683 = vand.u32 %v437, 4294901760
    %684 = vmatpush.msra.mxu0 %v683
    %v685 = vand.u32 %v436, 4294901760
    %v686 = vsub.f32 %v436, %v685
    %v687 = vand.u32 %v686, 4294901760
    %688 = vmatmul.f32.gmra.mxu0 %v687
    %v689 = vpop.f32.mrf.mxu0
    %v690 = vadd.f32 %v651, %v689
    %691 = vdwg.mxu0
    %v692 = vand.u32 %v452, 4294901760
    %v693 = vsub.f32 %v452, %v692
    %v694 = vand.u32 %v693, 4294901760
    %695 = vmatpush.msra.mxu0 %v694
    %v696 = vand.u32 %v451, 4294901760
    %v697 = vsub.f32 %v451, %v696
    %v698 = vand.u32 %v697, 4294901760
    %699 = vmatpush.msra.mxu0 %v698
    %v700 = vand.u32 %v450, 4294901760
    %v701 = vsub.f32 %v450, %v700
    %v702 = vand.u32 %v701, 4294901760
    %703 = vmatpush.msra.mxu0 %v702
    %v704 = vand.u32 %v449, 4294901760
    %v705 = vsub.f32 %v449, %v704
    %v706 = vand.u32 %v705, 4294901760
    %707 = vmatpush.msra.mxu0 %v706
    %v708 = vand.u32 %v448, 4294901760
    %v709 = vsub.f32 %v448, %v708
    %v710 = vand.u32 %v709, 4294901760
    %711 = vmatpush.msra.mxu0 %v710
    %v712 = vand.u32 %v447, 4294901760
    %v713 = vsub.f32 %v447, %v712
    %v714 = vand.u32 %v713, 4294901760
    %715 = vmatpush.msra.mxu0 %v714
    %v716 = vand.u32 %v446, 4294901760
    %v717 = vsub.f32 %v446, %v716
    %v718 = vand.u32 %v717, 4294901760
    %719 = vmatpush.msra.mxu0 %v718
    %v720 = vand.u32 %v445, 4294901760
    %v721 = vsub.f32 %v445, %v720
    %v722 = vand.u32 %v721, 4294901760
    %723 = vmatpush.msra.mxu0 %v722
    %v724 = vand.u32 %v444, 4294901760
    %v725 = vsub.f32 %v444, %v724
    %v726 = vand.u32 %v725, 4294901760
    %727 = vmatpush.msra.mxu0 %v726
    %v728 = vand.u32 %v443, 4294901760
    %v729 = vsub.f32 %v443, %v728
    %v730 = vand.u32 %v729, 4294901760
    %731 = vmatpush.msra.mxu0 %v730
    %v732 = vand.u32 %v442, 4294901760
    %v733 = vsub.f32 %v442, %v732
    %v734 = vand.u32 %v733, 4294901760
    %735 = vmatpush.msra.mxu0 %v734
    %v736 = vand.u32 %v441, 4294901760
    %v737 = vsub.f32 %v441, %v736
    %v738 = vand.u32 %v737, 4294901760
    %739 = vmatpush.msra.mxu0 %v738
    %v740 = vand.u32 %v440, 4294901760
    %v741 = vsub.f32 %v440, %v740
    %v742 = vand.u32 %v741, 4294901760
    %743 = vmatpush.msra.mxu0 %v742
    %v744 = vand.u32 %v439, 4294901760
    %v745 = vsub.f32 %v439, %v744
    %v746 = vand.u32 %v745, 4294901760
    %747 = vmatpush.msra.mxu0 %v746
    %v748 = vand.u32 %v438, 4294901760
    %v749 = vsub.f32 %v438, %v748
    %v750 = vand.u32 %v749, 4294901760
    %751 = vmatpush.msra.mxu0 %v750
    %v752 = vand.u32 %v437, 4294901760
    %v753 = vsub.f32 %v437, %v752
    %v754 = vand.u32 %v753, 4294901760
    %755 = vmatpush.msra.mxu0 %v754
    %v756 = vand.u32 %v436, 4294901760
    %757 = vmatmul.f32.gmra.mxu0 %v756
    %v758 = vpop.f32.mrf.mxu0
    %v759 = vadd.f32 %v690, %v758
    %760 = vdwg.mxu0
    %v761 = vand.u32 %v452, 4294901760
    %762 = vmatpush.msra.mxu0 %v761
    %v763 = vand.u32 %v451, 4294901760
    %764 = vmatpush.msra.mxu0 %v763
    %v765 = vand.u32 %v450, 4294901760
    %766 = vmatpush.msra.mxu0 %v765
    %v767 = vand.u32 %v449, 4294901760
    %768 = vmatpush.msra.mxu0 %v767
    %v769 = vand.u32 %v448, 4294901760
    %770 = vmatpush.msra.mxu0 %v769
    %v771 = vand.u32 %v447, 4294901760
    %772 = vmatpush.msra.mxu0 %v771
    %v773 = vand.u32 %v446, 4294901760
    %774 = vmatpush.msra.mxu0 %v773
    %v775 = vand.u32 %v445, 4294901760
    %776 = vmatpush.msra.mxu0 %v775
    %v777 = vand.u32 %v444, 4294901760
    %778 = vmatpush.msra.mxu0 %v777
    %v779 = vand.u32 %v443, 4294901760
    %780 = vmatpush.msra.mxu0 %v779
    %v781 = vand.u32 %v442, 4294901760
    %782 = vmatpush.msra.mxu0 %v781
    %v783 = vand.u32 %v441, 4294901760
    %784 = vmatpush.msra.mxu0 %v783
    %v785 = vand.u32 %v440, 4294901760
    %786 = vmatpush.msra.mxu0 %v785
    %v787 = vand.u32 %v439, 4294901760
    %788 = vmatpush.msra.mxu0 %v787
    %v789 = vand.u32 %v438, 4294901760
    %790 = vmatpush.msra.mxu0 %v789
    %v791 = vand.u32 %v437, 4294901760
    %792 = vmatpush.msra.mxu0 %v791
    %v793 = vand.u32 %v436, 4294901760
    %794 = vmatmul.f32.gmra.mxu0 %v793
    %v795 = vpop.f32.mrf.mxu0
    %v796 = vadd.f32 %v759, %v795
    %797 = vdwg.mxu0
    %v798 = vmax.f32 %v796, 0.0
    %v799 = vld [vmem:[#allocation7] sm:$0xff]
    %v800 = vld [vmem:[#allocation7 + $0x8] sm:$0xff]
    %v801 = vld [vmem:[#allocation7 + $0x10] sm:$0xff]
    %v802 = vld [vmem:[#allocation7 + $0x18] sm:$0xff]
    %v803 = vld [vmem:[#allocation7 + $0x20] sm:$0xff]
    %v804 = vld [vmem:[#allocation7 + $0x28] sm:$0xff]
    %v805 = vld [vmem:[#allocation7 + $0x30] sm:$0xff]
    %v806 = vld [vmem:[#allocation7 + $0x38] sm:$0xff]
    %v807 = vld [vmem:[#allocation7 + $0x40] sm:$0xff]
    %v808 = vld [vmem:[#allocation7 + $0x48] sm:$0xff]
    %v809 = vld [vmem:[#allocation7 + $0x50] sm:$0xff]
    %v810 = vld [vmem:[#allocation7 + $0x58] sm:$0xff]
    %v811 = vld [vmem:[#allocation7 + $0x60] sm:$0xff]
    %v812 = vld [vmem:[#allocation7 + $0x68] sm:$0xff]
    %v813 = vld [vmem:[#allocation7 + $0x70] sm:$0xff]
    %v814 = vld [vmem:[#allocation7 + $0x78] sm:$0xff]
    %v815 = vld [vmem:[%s6] sm:$0x1]
    %v817 = vperm.slane %v815, 0
    %v819 = vand.u32 %v814, 4294901760
    %820 = vmatpush.msra.mxu0 %v819
    %v821 = vand.u32 %v813, 4294901760
    %822 = vmatpush.msra.mxu0 %v821
    %v823 = vand.u32 %v812, 4294901760
    %824 = vmatpush.msra.mxu0 %v823
    %v825 = vand.u32 %v811, 4294901760
    %826 = vmatpush.msra.mxu0 %v825
    %v827 = vand.u32 %v810, 4294901760
    %828 = vmatpush.msra.mxu0 %v827
    %v829 = vand.u32 %v809, 4294901760
    %830 = vmatpush.msra.mxu0 %v829
    %v831 = vand.u32 %v808, 4294901760
    %832 = vmatpush.msra.mxu0 %v831
    %v833 = vand.u32 %v807, 4294901760
    %834 = vmatpush.msra.mxu0 %v833
    %v835 = vand.u32 %v806, 4294901760
    %836 = vmatpush.msra.mxu0 %v835
    %v837 = vand.u32 %v805, 4294901760
    %838 = vmatpush.msra.mxu0 %v837
    %v839 = vand.u32 %v804, 4294901760
    %840 = vmatpush.msra.mxu0 %v839
    %v841 = vand.u32 %v803, 4294901760
    %842 = vmatpush.msra.mxu0 %v841
    %v843 = vand.u32 %v802, 4294901760
    %844 = vmatpush.msra.mxu0 %v843
    %v845 = vand.u32 %v801, 4294901760
    %846 = vmatpush.msra.mxu0 %v845
    %v847 = vand.u32 %v800, 4294901760
    %848 = vmatpush.msra.mxu0 %v847
    %v849 = vand.u32 %v799, 4294901760
    %850 = vmatpush.msra.mxu0 %v849
    %v851 = vand.u32 %v798, 4294901760
    %v852 = vsub.f32 %v798, %v851
    %v853 = vand.u32 %v852, 4294901760
    %v854 = vsub.f32 %v852, %v853
    %v855 = vand.u32 %v854, 4294901760
    %856 = vmatmul.f32.gmra.mxu0 %v855
    %v857 = vpop.f32.mrf.mxu0
    %v858 = vadd.f32 %v817, %v857
    %859 = vdwg.mxu0
    %v860 = vand.u32 %v814, 4294901760
    %v861 = vsub.f32 %v814, %v860
    %v862 = vand.u32 %v861, 4294901760
    %v863 = vsub.f32 %v861, %v862
    %v864 = vand.u32 %v863, 4294901760
    %865 = vmatpush.msra.mxu0 %v864
    %v866 = vand.u32 %v813, 4294901760
    %v867 = vsub.f32 %v813, %v866
    %v868 = vand.u32 %v867, 4294901760
    %v869 = vsub.f32 %v867, %v868
    %v870 = vand.u32 %v869, 4294901760
    %871 = vmatpush.msra.mxu0 %v870
    %v872 = vand.u32 %v812, 4294901760
    %v873 = vsub.f32 %v812, %v872
    %v874 = vand.u32 %v873, 4294901760
    %v875 = vsub.f32 %v873, %v874
    %v876 = vand.u32 %v875, 4294901760
    %877 = vmatpush.msra.mxu0 %v876
    %v878 = vand.u32 %v811, 4294901760
    %v879 = vsub.f32 %v811, %v878
    %v880 = vand.u32 %v879, 4294901760
    %v881 = vsub.f32 %v879, %v880
    %v882 = vand.u32 %v881, 4294901760
    %883 = vmatpush.msra.mxu0 %v882
    %v884 = vand.u32 %v810, 4294901760
    %v885 = vsub.f32 %v810, %v884
    %v886 = vand.u32 %v885, 4294901760
    %v887 = vsub.f32 %v885, %v886
    %v888 = vand.u32 %v887, 4294901760
    %889 = vmatpush.msra.mxu0 %v888
    %v890 = vand.u32 %v809, 4294901760
    %v891 = vsub.f32 %v809, %v890
    %v892 = vand.u32 %v891, 4294901760
    %v893 = vsub.f32 %v891, %v892
    %v894 = vand.u32 %v893, 4294901760
    %895 = vmatpush.msra.mxu0 %v894
    %v896 = vand.u32 %v808, 4294901760
    %v897 = vsub.f32 %v808, %v896
    %v898 = vand.u32 %v897, 4294901760
    %v899 = vsub.f32 %v897, %v898
    %v900 = vand.u32 %v899, 4294901760
    %901 = vmatpush.msra.mxu0 %v900
    %v902 = vand.u32 %v807, 4294901760
    %v903 = vsub.f32 %v807, %v902
    %v904 = vand.u32 %v903, 4294901760
    %v905 = vsub.f32 %v903, %v904
    %v906 = vand.u32 %v905, 4294901760
    %907 = vmatpush.msra.mxu0 %v906
    %v908 = vand.u32 %v806, 4294901760
    %v909 = vsub.f32 %v806, %v908
    %v910 = vand.u32 %v909, 4294901760
    %v911 = vsub.f32 %v909, %v910
    %v912 = vand.u32 %v911, 4294901760
    %913 = vmatpush.msra.mxu0 %v912
    %v914 = vand.u32 %v805, 4294901760
    %v915 = vsub.f32 %v805, %v914
    %v916 = vand.u32 %v915, 4294901760
    %v917 = vsub.f32 %v915, %v916
    %v918 = vand.u32 %v917, 4294901760
    %919 = vmatpush.msra.mxu0 %v918
    %v920 = vand.u32 %v804, 4294901760
    %v921 = vsub.f32 %v804, %v920
    %v922 = vand.u32 %v921, 4294901760
    %v923 = vsub.f32 %v921, %v922
    %v924 = vand.u32 %v923, 4294901760
    %925 = vmatpush.msra.mxu0 %v924
    %v926 = vand.u32 %v803, 4294901760
    %v927 = vsub.f32 %v803, %v926
    %v928 = vand.u32 %v927, 4294901760
    %v929 = vsub.f32 %v927, %v928
    %v930 = vand.u32 %v929, 4294901760
    %931 = vmatpush.msra.mxu0 %v930
    %v932 = vand.u32 %v802, 4294901760
    %v933 = vsub.f32 %v802, %v932
    %v934 = vand.u32 %v933, 4294901760
    %v935 = vsub.f32 %v933, %v934
    %v936 = vand.u32 %v935, 4294901760
    %937 = vmatpush.msra.mxu0 %v936
    %v938 = vand.u32 %v801, 4294901760
    %v939 = vsub.f32 %v801, %v938
    %v940 = vand.u32 %v939, 4294901760
    %v941 = vsub.f32 %v939, %v940
    %v942 = vand.u32 %v941, 4294901760
    %943 = vmatpush.msra.mxu0 %v942
    %v944 = vand.u32 %v800, 4294901760
    %v945 = vsub.f32 %v800, %v944
    %v946 = vand.u32 %v945, 4294901760
    %v947 = vsub.f32 %v945, %v946
    %v948 = vand.u32 %v947, 4294901760
    %949 = vmatpush.msra.mxu0 %v948
    %v950 = vand.u32 %v799, 4294901760
    %v951 = vsub.f32 %v799, %v950
    %v952 = vand.u32 %v951, 4294901760
    %v953 = vsub.f32 %v951, %v952
    %v954 = vand.u32 %v953, 4294901760
    %955 = vmatpush.msra.mxu0 %v954
    %v956 = vand.u32 %v798, 4294901760
    %957 = vmatmul.f32.gmra.mxu0 %v956
    %v958 = vpop.f32.mrf.mxu0
    %v959 = vadd.f32 %v858, %v958
    %960 = vdwg.mxu0
    %v961 = vand.u32 %v814, 4294901760
    %v962 = vsub.f32 %v814, %v961
    %963 = vmatpush.msra.mxu0 %v962
    %v964 = vand.u32 %v813, 4294901760
    %v965 = vsub.f32 %v813, %v964
    %966 = vmatpush.msra.mxu0 %v965
    %v967 = vand.u32 %v812, 4294901760
    %v968 = vsub.f32 %v812, %v967
    %969 = vmatpush.msra.mxu0 %v968
    %v970 = vand.u32 %v811, 4294901760
    %v971 = vsub.f32 %v811, %v970
    %972 = vmatpush.msra.mxu0 %v971
    %v973 = vand.u32 %v810, 4294901760
    %v974 = vsub.f32 %v810, %v973
    %975 = vmatpush.msra.mxu0 %v974
    %v976 = vand.u32 %v809, 4294901760
    %v977 = vsub.f32 %v809, %v976
    %978 = vmatpush.msra.mxu0 %v977
    %v979 = vand.u32 %v808, 4294901760
    %v980 = vsub.f32 %v808, %v979
    %981 = vmatpush.msra.mxu0 %v980
    %v982 = vand.u32 %v807, 4294901760
    %v983 = vsub.f32 %v807, %v982
    %984 = vmatpush.msra.mxu0 %v983
    %v985 = vand.u32 %v806, 4294901760
    %v986 = vsub.f32 %v806, %v985
    %987 = vmatpush.msra.mxu0 %v986
    %v988 = vand.u32 %v805, 4294901760
    %v989 = vsub.f32 %v805, %v988
    %990 = vmatpush.msra.mxu0 %v989
    %v991 = vand.u32 %v804, 4294901760
    %v992 = vsub.f32 %v804, %v991
    %993 = vmatpush.msra.mxu0 %v992
    %v994 = vand.u32 %v803, 4294901760
    %v995 = vsub.f32 %v803, %v994
    %996 = vmatpush.msra.mxu0 %v995
    %v997 = vand.u32 %v802, 4294901760
    %v998 = vsub.f32 %v802, %v997
    %999 = vmatpush.msra.mxu0 %v998
    %v1000 = vand.u32 %v801, 4294901760
    %v1001 = vsub.f32 %v801, %v1000
    %1002 = vmatpush.msra.mxu0 %v1001
    %v1003 = vand.u32 %v800, 4294901760
    %v1004 = vsub.f32 %v800, %v1003
    %1005 = vmatpush.msra.mxu0 %v1004
    %v1006 = vand.u32 %v799, 4294901760
    %v1007 = vsub.f32 %v799, %v1006
    %1008 = vmatpush.msra.mxu0 %v1007
    %v1009 = vand.u32 %v798, 4294901760
    %v1010 = vsub.f32 %v798, %v1009
    %1011 = vmatmul.f32.gmra.mxu0 %v1010
    %v1012 = vpop.f32.mrf.mxu0
    %v1013 = vadd.f32 %v959, %v1012
    %1014 = vdwg.mxu0
    %v1015 = vand.u32 %v814, 4294901760
    %1016 = vmatpush.msra.mxu0 %v1015
    %v1017 = vand.u32 %v813, 4294901760
    %1018 = vmatpush.msra.mxu0 %v1017
    %v1019 = vand.u32 %v812, 4294901760
    %1020 = vmatpush.msra.mxu0 %v1019
    %v1021 = vand.u32 %v811, 4294901760
    %1022 = vmatpush.msra.mxu0 %v1021
    %v1023 = vand.u32 %v810, 4294901760
    %1024 = vmatpush.msra.mxu0 %v1023
    %v1025 = vand.u32 %v809, 4294901760
    %1026 = vmatpush.msra.mxu0 %v1025
    %v1027 = vand.u32 %v808, 4294901760
    %1028 = vmatpush.msra.mxu0 %v1027
    %v1029 = vand.u32 %v807, 4294901760
    %1030 = vmatpush.msra.mxu0 %v1029
    %v1031 = vand.u32 %v806, 4294901760
    %1032 = vmatpush.msra.mxu0 %v1031
    %v1033 = vand.u32 %v805, 4294901760
    %1034 = vmatpush.msra.mxu0 %v1033
    %v1035 = vand.u32 %v804, 4294901760
    %1036 = vmatpush.msra.mxu0 %v1035
    %v1037 = vand.u32 %v803, 4294901760
    %1038 = vmatpush.msra.mxu0 %v1037
    %v1039 = vand.u32 %v802, 4294901760
    %1040 = vmatpush.msra.mxu0 %v1039
    %v1041 = vand.u32 %v801, 4294901760
    %1042 = vmatpush.msra.mxu0 %v1041
    %v1043 = vand.u32 %v800, 4294901760
    %1044 = vmatpush.msra.mxu0 %v1043
    %v1045 = vand.u32 %v799, 4294901760
    %1046 = vmatpush.msra.mxu0 %v1045
    %v1047 = vand.u32 %v798, 4294901760
    %v1048 = vsub.f32 %v798, %v1047
    %v1049 = vand.u32 %v1048, 4294901760
    %1050 = vmatmul.f32.gmra.mxu0 %v1049
    %v1051 = vpop.f32.mrf.mxu0
    %v1052 = vadd.f32 %v1013, %v1051
    %1053 = vdwg.mxu0
    %v1054 = vand.u32 %v814, 4294901760
    %v1055 = vsub.f32 %v814, %v1054
    %v1056 = vand.u32 %v1055, 4294901760
    %1057 = vmatpush.msra.mxu0 %v1056
    %v1058 = vand.u32 %v813, 4294901760
    %v1059 = vsub.f32 %v813, %v1058
    %v1060 = vand.u32 %v1059, 4294901760
    %1061 = vmatpush.msra.mxu0 %v1060
    %v1062 = vand.u32 %v812, 4294901760
    %v1063 = vsub.f32 %v812, %v1062
    %v1064 = vand.u32 %v1063, 4294901760
    %1065 = vmatpush.msra.mxu0 %v1064
    %v1066 = vand.u32 %v811, 4294901760
    %v1067 = vsub.f32 %v811, %v1066
    %v1068 = vand.u32 %v1067, 4294901760
    %1069 = vmatpush.msra.mxu0 %v1068
    %v1070 = vand.u32 %v810, 4294901760
    %v1071 = vsub.f32 %v810, %v1070
    %v1072 = vand.u32 %v1071, 4294901760
    %1073 = vmatpush.msra.mxu0 %v1072
    %v1074 = vand.u32 %v809, 4294901760
    %v1075 = vsub.f32 %v809, %v1074
    %v1076 = vand.u32 %v1075, 4294901760
    %1077 = vmatpush.msra.mxu0 %v1076
    %v1078 = vand.u32 %v808, 4294901760
    %v1079 = vsub.f32 %v808, %v1078
    %v1080 = vand.u32 %v1079, 4294901760
    %1081 = vmatpush.msra.mxu0 %v1080
    %v1082 = vand.u32 %v807, 4294901760
    %v1083 = vsub.f32 %v807, %v1082
    %v1084 = vand.u32 %v1083, 4294901760
    %1085 = vmatpush.msra.mxu0 %v1084
    %v1086 = vand.u32 %v806, 4294901760
    %v1087 = vsub.f32 %v806, %v1086
    %v1088 = vand.u32 %v1087, 4294901760
    %1089 = vmatpush.msra.mxu0 %v1088
    %v1090 = vand.u32 %v805, 4294901760
    %v1091 = vsub.f32 %v805, %v1090
    %v1092 = vand.u32 %v1091, 4294901760
    %1093 = vmatpush.msra.mxu0 %v1092
    %v1094 = vand.u32 %v804, 4294901760
    %v1095 = vsub.f32 %v804, %v1094
    %v1096 = vand.u32 %v1095, 4294901760
    %1097 = vmatpush.msra.mxu0 %v1096
    %v1098 = vand.u32 %v803, 4294901760
    %v1099 = vsub.f32 %v803, %v1098
    %v1100 = vand.u32 %v1099, 4294901760
    %1101 = vmatpush.msra.mxu0 %v1100
    %v1102 = vand.u32 %v802, 4294901760
    %v1103 = vsub.f32 %v802, %v1102
    %v1104 = vand.u32 %v1103, 4294901760
    %1105 = vmatpush.msra.mxu0 %v1104
    %v1106 = vand.u32 %v801, 4294901760
    %v1107 = vsub.f32 %v801, %v1106
    %v1108 = vand.u32 %v1107, 4294901760
    %1109 = vmatpush.msra.mxu0 %v1108
    %v1110 = vand.u32 %v800, 4294901760
    %v1111 = vsub.f32 %v800, %v1110
    %v1112 = vand.u32 %v1111, 4294901760
    %1113 = vmatpush.msra.mxu0 %v1112
    %v1114 = vand.u32 %v799, 4294901760
    %v1115 = vsub.f32 %v799, %v1114
    %v1116 = vand.u32 %v1115, 4294901760
    %1117 = vmatpush.msra.mxu0 %v1116
    %v1118 = vand.u32 %v798, 4294901760
    %1119 = vmatmul.f32.gmra.mxu0 %v1118
    %v1120 = vpop.f32.mrf.mxu0
    %v1121 = vadd.f32 %v1052, %v1120
    %1122 = vdwg.mxu0
    %v1123 = vand.u32 %v814, 4294901760
    %1124 = vmatpush.msra.mxu0 %v1123
    %v1125 = vand.u32 %v813, 4294901760
    %1126 = vmatpush.msra.mxu0 %v1125
    %v1127 = vand.u32 %v812, 4294901760
    %1128 = vmatpush.msra.mxu0 %v1127
    %v1129 = vand.u32 %v811, 4294901760
    %1130 = vmatpush.msra.mxu0 %v1129
    %v1131 = vand.u32 %v810, 4294901760
    %1132 = vmatpush.msra.mxu0 %v1131
    %v1133 = vand.u32 %v809, 4294901760
    %1134 = vmatpush.msra.mxu0 %v1133
    %v1135 = vand.u32 %v808, 4294901760
    %1136 = vmatpush.msra.mxu0 %v1135
    %v1137 = vand.u32 %v807, 4294901760
    %1138 = vmatpush.msra.mxu0 %v1137
    %v1139 = vand.u32 %v806, 4294901760
    %1140 = vmatpush.msra.mxu0 %v1139
    %v1141 = vand.u32 %v805, 4294901760
    %1142 = vmatpush.msra.mxu0 %v1141
    %v1143 = vand.u32 %v804, 4294901760
    %1144 = vmatpush.msra.mxu0 %v1143
    %v1145 = vand.u32 %v803, 4294901760
    %1146 = vmatpush.msra.mxu0 %v1145
    %v1147 = vand.u32 %v802, 4294901760
    %1148 = vmatpush.msra.mxu0 %v1147
    %v1149 = vand.u32 %v801, 4294901760
    %1150 = vmatpush.msra.mxu0 %v1149
    %v1151 = vand.u32 %v800, 4294901760
    %1152 = vmatpush.msra.mxu0 %v1151
    %v1153 = vand.u32 %v799, 4294901760
    %1154 = vmatpush.msra.mxu0 %v1153
    %v1155 = vand.u32 %v798, 4294901760
    %1156 = vmatmul.f32.gmra.mxu0 %v1155
    %v1157 = vpop.f32.mrf.mxu0
    %v1158 = vadd.f32 %v1121, %v1157
    %1159 = vdwg.mxu0
    %1160 = vst [vmem:[#allocation8] sm:$0xff] %v1158
    // Predicated region
    $region42: #{forward.1} parent=1 // pred_check
      _
    $region43: #{forward.1} parent=1 // pred_check_branch
      %1162 = sbr.rel (0) target = $region45
    $region44: #{forward.1} parent=1 // pred_region
      %1164 = vsyncadd [#allocation4], 0
      %s1166 = sshll.u32 [#allocation8], 4
      %s1167 = int_to_ptr.vmem [resolvable:$true] %s1166
      %s1168 = sshll.u32 %s7, 4
      %s1169 = int_to_ptr.hbm [resolvable:$true] %s1168
      %1171 = dma.vmem_to_hbm [thread:$0]  %s1167, 128, %s1169, [#allocation4]
    $region45: #{forward.1} parent=1 // pred_fallthru
      _
    // Predicated region
    $region46: #{forward.1} parent=1 // pred_check
      _
    $region47: #{forward.1} parent=1 // pred_check_branch
      %1173 = sbr.rel (0) target = $region49
    $region48: #{forward.1} parent=1 // pred_region
      %1175 = dma.done [#allocation4], 128
    $region49: #{forward.1} parent=1 // pred_fallthru
      _
    %1176 = vsyncpa [#allocation3], 1
    %1177 = vsyncpa [#allocation6], 1
    %1178 = vsyncpa [#allocation4], 1

</llo_original>
